<compile_context>
chip_gen: v7x
topology: tpu7x:2x2x1
jax: 0.10.0
libtpu: 0.0.40
codegen_flags: <defaults>
</compile_context>

<pallas_src>
import functools

import jax
import jax.numpy as jnp
from jax.experimental import pallas as pl
from jax.experimental.pallas import tpu as pltpu


def _round_up(n, m):
    return ((n + m - 1) // m) * m


# ---------------------------------------------------------------------------
# Kernel: 3 fused matmuls on a batch tile, all params read from one VMEM slab.
# Packed slab layout (all row offsets 8-aligned, all widths = `lanes` >= 128):
#   rows [0,                         d_in_pad)                 : W12 (valid cols [0, 32))
#   rows [d_in_pad,                  d_in_pad+h1_pad)          : W34 (valid cols [0, 8))
#   rows [d_in_pad+h1_pad,           d_in_pad+h1_pad+h2_pad)   : W5  (valid cols [0, output_dim))
#   row   d_in_pad+h1_pad+h2_pad      : b12
#   row   d_in_pad+h1_pad+h2_pad + 1  : b34
#   row   d_in_pad+h1_pad+h2_pad + 2  : b5
# Zero-padded rows/cols propagate zeros through relu, so padded math is exact.
# ---------------------------------------------------------------------------
def mlp_kernel(x_ref, p_ref, o_ref, *, d_in_pad, h1_pad, h2_pad, out_pad):
    r_w34 = d_in_pad
    r_w5 = r_w34 + h1_pad
    r_b = r_w5 + h2_pad

    x = x_ref[...]                                          # (block_b, d_in_pad)

    w12 = p_ref[pl.ds(0, d_in_pad), pl.ds(0, h1_pad)]       # (d_in_pad, 128)
    w34 = p_ref[pl.ds(r_w34, h1_pad), pl.ds(0, h2_pad)]     # (128, 128)
    w5 = p_ref[pl.ds(r_w5, h2_pad), pl.ds(0, out_pad)]      # (128, out_pad)
    b12 = p_ref[pl.ds(r_b, 1), pl.ds(0, h1_pad)]            # (1, 128)
    b34 = p_ref[pl.ds(r_b + 1, 1), pl.ds(0, h2_pad)]        # (1, 128)
    b5 = p_ref[pl.ds(r_b + 2, 1), pl.ds(0, out_pad)]        # (1, out_pad)

    # Fused (linear1 ∘ linear2) + relu
    a1 = jnp.maximum(
        jnp.dot(x, w12, preferred_element_type=jnp.float32) + b12, 0.0)
    # Fused (linear3 ∘ linear4) + relu
    a2 = jnp.maximum(
        jnp.dot(a1, w34, preferred_element_type=jnp.float32) + b34, 0.0)
    # linear5 + sigmoid (padded lanes produce sigmoid(0)=0.5, sliced off in the wrapper)
    h5 = jnp.dot(a2, w5, preferred_element_type=jnp.float32) + b5
    o_ref[...] = jax.nn.sigmoid(h5)


# ---------------------------------------------------------------------------
# Parameter prep: algebraic fusion + packing into one lane-padded slab.
# ---------------------------------------------------------------------------
def fuse_and_pack_params(params, input_dim, output_dim):
    (w1, b1), (w2, b2), (w3, b3), (w4, b4), (w5, b5) = params

    # No nonlinearity between linear1/linear2 nor between linear3/linear4 -> fuse.
    w12 = w1 @ w2                      # (d_in, 32)
    b12 = b1 @ w2 + b2                 # (1, 32)
    w34 = w3 @ w4                      # (32, 8)
    b34 = b3 @ w4 + b4                 # (1, 8)

    d_in = w12.shape[0]
    h1 = w12.shape[1]                  # 32
    h2 = w34.shape[1]                  # 8

    d_in_pad = _round_up(max(d_in, 8), 8)
    h1_pad = _round_up(h1, 128)        # 128
    h2_pad = _round_up(h2, 128)        # 128
    out_pad = _round_up(max(output_dim, 128), 128)
    lanes = max(h1_pad, h2_pad, out_pad)

    def pad_to(a, rows, cols):
        a = jnp.asarray(a, jnp.float32)
        return jnp.pad(a, ((0, rows - a.shape[0]), (0, cols - a.shape[1])))

    rows_total = d_in_pad + h1_pad + h2_pad + 3
    rows_pad = _round_up(rows_total, 8)

    packed = jnp.concatenate(
        [
            pad_to(w12, d_in_pad, lanes),
            pad_to(w34, h1_pad, lanes),
            pad_to(w5, h2_pad, lanes),
            pad_to(b12, 1, lanes),
            pad_to(b34, 1, lanes),
            pad_to(b5, 1, lanes),
            jnp.zeros((rows_pad - rows_total, lanes), jnp.float32),
        ],
        axis=0,
    )
    dims = dict(d_in=d_in, d_in_pad=d_in_pad, h1_pad=h1_pad, h2_pad=h2_pad,
                out_pad=out_pad, lanes=lanes, rows_pad=rows_pad)
    return packed, dims


def _pick_block_b(B, cap=1024):
    """Largest batch tile <= cap that divides B and is sublane-aligned (or the full batch)."""
    if B <= cap:
        return B
    bb = cap - (cap % 8)
    while bb >= 8:
        if B % bb == 0:
            return bb
        bb -= 8
    return B


# ---------------------------------------------------------------------------
# Wrapper
# ---------------------------------------------------------------------------
def mlp_forward(x, params, *, block_b=None):
    B, input_dim = x.shape
    output_dim = params[4][0].shape[1]

    packed, dims = fuse_and_pack_params(params, input_dim, output_dim)
    d_in_pad = dims["d_in_pad"]
    out_pad = dims["out_pad"]
    lanes = dims["lanes"]
    rows_pad = dims["rows_pad"]

    # Pad the feature dim so the contraction lines up with the (zero-padded) packed W12 rows.
    if d_in_pad != input_dim:
        x = jnp.pad(x, ((0, 0), (0, d_in_pad - input_dim)))

    if block_b is None:
        block_b = _pick_block_b(B)
    assert B % block_b == 0, "block_b must divide the batch size"
    grid = (B // block_b,)

    kernel = functools.partial(
        mlp_kernel, d_in_pad=d_in_pad, h1_pad=dims["h1_pad"],
        h2_pad=dims["h2_pad"], out_pad=out_pad)

    in_specs = [
        # batch tile of activations (double-buffered across grid steps)
        pl.BlockSpec((block_b, d_in_pad), lambda i: (i, 0)),
        # single packed parameter slab; constant index -> one DMA, stays resident in VMEM
        pl.BlockSpec((rows_pad, lanes), lambda i: (0, 0)),
    ]
    # Lane-dense output: full 128-lane (out_pad) stores; real columns sliced below.
    out_spec = pl.BlockSpec((block_b, out_pad), lambda i: (i, 0))

    out_padded = pl.pallas_call(
        kernel,
        out_shape=jax.ShapeDtypeStruct((B, out_pad), jnp.float32),
        grid=grid,
        in_specs=in_specs,
        out_specs=out_spec,
        compiler_params=pltpu.CompilerParams(
            dimension_semantics=("parallel",)),
    )(x, packed)

    return out_padded[:, :output_dim]


# ---------------------------------------------------------------------------
# Parameter init (PyTorch nn.Linear-style) and pure-JAX reference (unfused).
# ---------------------------------------------------------------------------
def init_linear(key, in_dim, out_dim):
    kw, kb = jax.random.split(key)
    bound = 1.0 / jnp.sqrt(jnp.float32(in_dim))
    w = jax.random.uniform(kw, (in_dim, out_dim), jnp.float32, -bound, bound)
    b = jax.random.uniform(kb, (1, out_dim), jnp.float32, -bound, bound)
    return w, b


def make_params(key, input_dim, output_dim):
    dims = [input_dim, 64, 32, 16, 8, output_dim]
    keys = jax.random.split(key, 5)
    return tuple(init_linear(keys[i], dims[i], dims[i + 1]) for i in range(5))


def mlp_reference(x, params):
    (w1, b1), (w2, b2), (w3, b3), (w4, b4), (w5, b5) = params
    h1 = x @ w1 + b1
    h2 = jnp.maximum(h1 @ w2 + b2, 0.0)
    h3 = h2 @ w3 + b3
    h4 = jnp.maximum(h3 @ w4 + b4, 0.0)
    h5 = h4 @ w5 + b5
    return jax.nn.sigmoid(h5)


if __name__ == "__main__":
    key = jax.random.PRNGKey(0)
    k_x, k_p = jax.random.split(key)

    batch = 256          # small, but enough rows to exercise batch tiling as well
    input_dim = 30       # breast-cancer dataset feature count
    output_dim = 1

    x = jax.random.normal(k_x, (batch, input_dim), jnp.float32)
    params = make_params(k_p, input_dim, output_dim)

    ref = mlp_reference(x, params)

    # Default path: whole batch in one grid step (minimal per-step overhead).
    out = jax.block_until_ready(mlp_forward(x, params))
    assert out.shape == (batch, output_dim)
    assert jnp.allclose(out, ref, atol=1e-5), "mismatch vs reference (grid=1)"

    # Tiled path: grid = (4,), exercises the double-buffered batch pipeline.
    out_tiled = jax.block_until_ready(mlp_forward(x, params, block_b=64))
    assert jnp.allclose(out_tiled, ref, atol=1e-5), "mismatch vs reference (tiled)"

    print("KERNEL_OK")
</pallas_src>

<mosaic_0001>
module attributes {stable_mosaic.version = 11 : i64} {
  func.func @mlp_kernel(%arg0: i32, %arg1: memref<256x32xf32, #tpu.memory_space<vmem>>, %arg2: memref<296x128xf32, #tpu.memory_space<vmem>>, %arg3: memref<256x128xf32, #tpu.memory_space<vmem>>) attributes {dimension_semantics = [#tpu.dimension_semantics<parallel>], iteration_bounds = array<i64: 1>, scalar_prefetch = 0 : i64, scratch_operands = 0 : i64, tpu.core_type = #tpu.core_type<tc>, window_params = [{transform_indices = @transform_0, window_bounds = array<i64: 256, 32>}, {pipeline_mode = #tpu.pipeline_mode<synchronous>, transform_indices = @transform_1, window_bounds = array<i64: 296, 128>}, {transform_indices = @transform_2, window_bounds = array<i64: 256, 128>}]} {
    %c0 = arith.constant 0 : index
    %c0_0 = arith.constant 0 : index
    %0 = vector.load %arg1[%c0, %c0_0] : memref<256x32xf32, #tpu.memory_space<vmem>>, vector<256x32xf32>
    %c0_1 = arith.constant 0 : index
    %c0_2 = arith.constant 0 : index
    %1 = vector.load %arg2[%c0_1, %c0_2] : memref<296x128xf32, #tpu.memory_space<vmem>>, vector<32x128xf32>
    %c32 = arith.constant 32 : index
    %c0_3 = arith.constant 0 : index
    %2 = vector.load %arg2[%c32, %c0_3] : memref<296x128xf32, #tpu.memory_space<vmem>>, vector<128x128xf32>
    %c160 = arith.constant 160 : index
    %c0_4 = arith.constant 0 : index
    %3 = vector.load %arg2[%c160, %c0_4] : memref<296x128xf32, #tpu.memory_space<vmem>>, vector<128x128xf32>
    %c288 = arith.constant 288 : index
    %c0_5 = arith.constant 0 : index
    %4 = vector.load %arg2[%c288, %c0_5] : memref<296x128xf32, #tpu.memory_space<vmem>>, vector<1x128xf32>
    %c289 = arith.constant 289 : index
    %c0_6 = arith.constant 0 : index
    %5 = vector.load %arg2[%c289, %c0_6] : memref<296x128xf32, #tpu.memory_space<vmem>>, vector<1x128xf32>
    %c290 = arith.constant 290 : index
    %c0_7 = arith.constant 0 : index
    %6 = vector.load %arg2[%c290, %c0_7] : memref<296x128xf32, #tpu.memory_space<vmem>>, vector<1x128xf32>
    %cst = arith.constant dense<0.000000e+00> : vector<256x128xf32>
    %7 = tpu.matmul %0, %1, %cst {dimension_numbers = #tpu.dot_dimension_numbers<[1], [0], [0], [1], [0, 0, 1, 1], [], []>} : vector<256x32xf32>, vector<32x128xf32>, vector<256x128xf32> -> vector<256x128xf32>
    %8 = vector.broadcast %4 : vector<1x128xf32> to vector<256x128xf32>
    %9 = arith.addf %7, %8 : vector<256x128xf32>
    %cst_8 = arith.constant 0.000000e+00 : f32
    %10 = vector.broadcast %cst_8 : f32 to vector<256x128xf32>
    %11 = arith.maximumf %9, %10 : vector<256x128xf32>
    %cst_9 = arith.constant dense<0.000000e+00> : vector<256x128xf32>
    %12 = tpu.matmul %11, %2, %cst_9 {dimension_numbers = #tpu.dot_dimension_numbers<[1], [0], [0], [1], [0, 0, 1, 1], [], []>} : vector<256x128xf32>, vector<128x128xf32>, vector<256x128xf32> -> vector<256x128xf32>
    %13 = vector.broadcast %5 : vector<1x128xf32> to vector<256x128xf32>
    %14 = arith.addf %12, %13 : vector<256x128xf32>
    %cst_10 = arith.constant 0.000000e+00 : f32
    %15 = vector.broadcast %cst_10 : f32 to vector<256x128xf32>
    %16 = arith.maximumf %14, %15 : vector<256x128xf32>
    %cst_11 = arith.constant dense<0.000000e+00> : vector<256x128xf32>
    %17 = tpu.matmul %16, %3, %cst_11 {dimension_numbers = #tpu.dot_dimension_numbers<[1], [0], [0], [1], [0, 0, 1, 1], [], []>} : vector<256x128xf32>, vector<128x128xf32>, vector<256x128xf32> -> vector<256x128xf32>
    %18 = vector.broadcast %6 : vector<1x128xf32> to vector<256x128xf32>
    %19 = arith.addf %17, %18 : vector<256x128xf32>
    %20 = arith.negf %19 : vector<256x128xf32>
    %21 = math.exp %20 : vector<256x128xf32>
    %cst_12 = arith.constant 1.000000e+00 : f32
    %22 = vector.broadcast %cst_12 : f32 to vector<256x128xf32>
    %23 = arith.addf %22, %21 : vector<256x128xf32>
    %24 = arith.divf %22, %23 : vector<256x128xf32>
    %c0_13 = arith.constant 0 : index
    %c0_14 = arith.constant 0 : index
    %25 = vector.load %arg3[%c0_13, %c0_14] : memref<256x128xf32, #tpu.memory_space<vmem>>, vector<256x128xf32>
    tpu.vector_store %arg3[%c0_13, %c0_14], %24 {strides = array<i32>} : memref<256x128xf32, #tpu.memory_space<vmem>>, vector<256x128xf32>,
    return
  }
  func.func @transform_0(%arg0: i32) -> (i32, i32) {
    %c0_i32 = arith.constant 0 : i32
    %c0_i32_0 = arith.constant 0 : i32
    return %arg0, %c0_i32 : i32, i32
  }
  func.func @transform_1(%arg0: i32) -> (i32, i32) {
    %c0_i32 = arith.constant 0 : i32
    %c0_i32_0 = arith.constant 0 : i32
    %c0_i32_1 = arith.constant 0 : i32
    return %c0_i32, %c0_i32_0 : i32, i32
  }
  func.func @transform_2(%arg0: i32) -> (i32, i32) {
    %c0_i32 = arith.constant 0 : i32
    %c0_i32_0 = arith.constant 0 : i32
    return %arg0, %c0_i32 : i32, i32
  }
}

</mosaic_0001>

<llo_original>
// kernel: tpu_custom_call.1
$region0: #{tpu_custom_call.1}
  #allocation0 [shape = 'u32[]', space=smem, size = 0x4, offset = 0x4, fixed_abs, tag = 'smem constant byte address 0x4 - core index']
  #allocation1 [shape = 'u32[144,128]{1,0:T(1,128)}', space=vmem, size = 0x12000, scoped, tag = 'internal scratch']
  %s0 = inlined_call_operand.vmem [shape: f32[256,32], index: 0, kind: input, shape index: {}]
  %s1 = inlined_call_operand.vmem [shape: f32[296,128], index: 1, kind: input, shape index: {}]
  %s2 = inlined_call_operand.hbm [shape: f32[256,128], index: 2, kind: output, shape index: {}]
  %s3 = sld [smem:[#allocation0]]
  $region18: #{tpu_custom_call.1} parent=0
    _
  %s5 = ssub.s32 1, %s3
  %s6 = scalar_select 0, %s5, %s3
  $region1: #{tpu_custom_call.1} parent=0
    #allocation2 [shape = 'u8[131072]{0}', space=vmem, size = 0x20000, scoped, tag = 'output window, operand 0, single buffered']
    #allocation3 [shape = 's32[1]{0}', space=sflag, size = 0x4, scoped, tag = 'scoped memory for tpu_custom_call.1']
    %7 = vsyncpa [#allocation3], 0
    // Predicated region
    $region2: #{tpu_custom_call.1} parent=1 // pred_check
      _
    $region3: #{tpu_custom_call.1} parent=1 // pred_check_branch
      %9 = sbr.rel (0) target = $region5
    $region4: #{tpu_custom_call.1} parent=1 // pred_region
      _
    $region5: #{tpu_custom_call.1} parent=1 // pred_fallthru
      _
    // Predicated region
    $region6: #{tpu_custom_call.1} parent=1 // pred_check
      _
    $region7: #{tpu_custom_call.1} parent=1 // pred_check_branch
      %11 = sbr.rel (0) target = $region9
    $region8: #{tpu_custom_call.1} parent=1 // pred_region
      _
    $region9: #{tpu_custom_call.1} parent=1 // pred_fallthru
      _
    %v12 = vld [vmem:[%s0] sm:$0xff]
    %v13 = vld [vmem:[%s0 + $0x8] sm:$0xff]
    %v14 = vld [vmem:[%s0 + $0x10] sm:$0xff]
    %v15 = vld [vmem:[%s0 + $0x18] sm:$0xff]
    %v16 = vld [vmem:[%s0 + $0x20] sm:$0xff]
    %v17 = vld [vmem:[%s0 + $0x28] sm:$0xff]
    %v18 = vld [vmem:[%s0 + $0x30] sm:$0xff]
    %v19 = vld [vmem:[%s0 + $0x38] sm:$0xff]
    %v20 = vld [vmem:[%s0 + $0x40] sm:$0xff]
    %v21 = vld [vmem:[%s0 + $0x48] sm:$0xff]
    %v22 = vld [vmem:[%s0 + $0x50] sm:$0xff]
    %v23 = vld [vmem:[%s0 + $0x58] sm:$0xff]
    %v24 = vld [vmem:[%s0 + $0x60] sm:$0xff]
    %v25 = vld [vmem:[%s0 + $0x68] sm:$0xff]
    %v26 = vld [vmem:[%s0 + $0x70] sm:$0xff]
    %v27 = vld [vmem:[%s0 + $0x78] sm:$0xff]
    %v28 = vld [vmem:[%s0 + $0x80] sm:$0xff]
    %v29 = vld [vmem:[%s0 + $0x88] sm:$0xff]
    %v30 = vld [vmem:[%s0 + $0x90] sm:$0xff]
    %v31 = vld [vmem:[%s0 + $0x98] sm:$0xff]
    %v32 = vld [vmem:[%s0 + $0xa0] sm:$0xff]
    %v33 = vld [vmem:[%s0 + $0xa8] sm:$0xff]
    %v34 = vld [vmem:[%s0 + $0xb0] sm:$0xff]
    %v35 = vld [vmem:[%s0 + $0xb8] sm:$0xff]
    %v36 = vld [vmem:[%s0 + $0xc0] sm:$0xff]
    %v37 = vld [vmem:[%s0 + $0xc8] sm:$0xff]
    %v38 = vld [vmem:[%s0 + $0xd0] sm:$0xff]
    %v39 = vld [vmem:[%s0 + $0xd8] sm:$0xff]
    %v40 = vld [vmem:[%s0 + $0xe0] sm:$0xff]
    %v41 = vld [vmem:[%s0 + $0xe8] sm:$0xff]
    %v42 = vld [vmem:[%s0 + $0xf0] sm:$0xff]
    %v43 = vld [vmem:[%s0 + $0xf8] sm:$0xff]
    %v44 = vld [vmem:[%s1] sm:$0xff]
    %v45 = vld [vmem:[%s1 + $0x8] sm:$0xff]
    %v46 = vld [vmem:[%s1 + $0x10] sm:$0xff]
    %v47 = vld [vmem:[%s1 + $0x18] sm:$0xff]
    %v48 = vld [vmem:[%s1 + $0x20] sm:$0xff]
    %v49 = vld [vmem:[%s1 + $0x28] sm:$0xff]
    %v50 = vld [vmem:[%s1 + $0x30] sm:$0xff]
    %v51 = vld [vmem:[%s1 + $0x38] sm:$0xff]
    %v52 = vld [vmem:[%s1 + $0x40] sm:$0xff]
    %v53 = vld [vmem:[%s1 + $0x48] sm:$0xff]
    %v54 = vld [vmem:[%s1 + $0x50] sm:$0xff]
    %v55 = vld [vmem:[%s1 + $0x58] sm:$0xff]
    %v56 = vld [vmem:[%s1 + $0x60] sm:$0xff]
    %v57 = vld [vmem:[%s1 + $0x68] sm:$0xff]
    %v58 = vld [vmem:[%s1 + $0x70] sm:$0xff]
    %v59 = vld [vmem:[%s1 + $0x78] sm:$0xff]
    %v60 = vld [vmem:[%s1 + $0x80] sm:$0xff]
    %v61 = vld [vmem:[%s1 + $0x88] sm:$0xff]
    %v62 = vld [vmem:[%s1 + $0x90] sm:$0xff]
    %v63 = vld [vmem:[%s1 + $0x98] sm:$0xff]
    %v64 = vld [vmem:[%s1 + $0xa0] sm:$0xff]
    %v65 = vld [vmem:[%s1 + $0xa8] sm:$0xff]
    %v66 = vld [vmem:[%s1 + $0xb0] sm:$0xff]
    %v67 = vld [vmem:[%s1 + $0xb8] sm:$0xff]
    %v68 = vld [vmem:[%s1 + $0xc0] sm:$0xff]
    %v69 = vld [vmem:[%s1 + $0xc8] sm:$0xff]
    %v70 = vld [vmem:[%s1 + $0xd0] sm:$0xff]
    %v71 = vld [vmem:[%s1 + $0xd8] sm:$0xff]
    %v72 = vld [vmem:[%s1 + $0xe0] sm:$0xff]
    %v73 = vld [vmem:[%s1 + $0xe8] sm:$0xff]
    %v74 = vld [vmem:[%s1 + $0xf0] sm:$0xff]
    %v75 = vld [vmem:[%s1 + $0xf8] sm:$0xff]
    %v76 = vld [vmem:[%s1 + $0x100] sm:$0xff]
    %v77 = vld [vmem:[%s1 + $0x108] sm:$0xff]
    %v78 = vld [vmem:[%s1 + $0x110] sm:$0xff]
    %v79 = vld [vmem:[%s1 + $0x118] sm:$0xff]
    %v80 = vld [vmem:[%s1 + $0x120] sm:$0x1]
    %v81 = vld [vmem:[%s1 + $0x121] sm:$0x1]
    %v82 = vld [vmem:[%s1 + $0x122] sm:$0x1]
    %v83 = vlaneseq
    %v84 = vshrl.u32 %v83, 7
    %v85 = vsub.s32 0, %v84
    %v86 = vrot.slane %v80, %v85
    %vm87 = vcmask 261120
    %v89 = vsel %vm87, %v12, 0
    %v92 = vsel %vm87, %v13, 0
    %v95 = vsel %vm87, %v14, 0
    %v98 = vsel %vm87, %v15, 0
    %v101 = vsel %vm87, %v16, 0
    %v104 = vsel %vm87, %v17, 0
    %v107 = vsel %vm87, %v18, 0
    %v110 = vsel %vm87, %v19, 0
    %v113 = vsel %vm87, %v20, 0
    %v116 = vsel %vm87, %v21, 0
    %v119 = vsel %vm87, %v22, 0
    %v122 = vsel %vm87, %v23, 0
    %v125 = vsel %vm87, %v24, 0
    %v128 = vsel %vm87, %v25, 0
    %v131 = vsel %vm87, %v26, 0
    %v134 = vsel %vm87, %v27, 0
    %v137 = vsel %vm87, %v28, 0
    %v140 = vsel %vm87, %v29, 0
    %v143 = vsel %vm87, %v30, 0
    %v146 = vsel %vm87, %v31, 0
    %v149 = vsel %vm87, %v32, 0
    %v152 = vsel %vm87, %v33, 0
    %v155 = vsel %vm87, %v34, 0
    %v158 = vsel %vm87, %v35, 0
    %v161 = vsel %vm87, %v36, 0
    %v164 = vsel %vm87, %v37, 0
    %v167 = vsel %vm87, %v38, 0
    %v170 = vsel %vm87, %v39, 0
    %v173 = vsel %vm87, %v40, 0
    %v176 = vsel %vm87, %v41, 0
    %v179 = vsel %vm87, %v42, 0
    %v182 = vsel %vm87, %v43, 0
    %184 = vmatprep.subr.mxu0 0.0
    %185 = vmatpush1.msra.mxu0 %v44
    %186 = vmatprep.subr.mxu0 0.0
    %187 = vmatpush1.msra.mxu0 %v45
    %188 = vmatprep.subr.mxu0 0.0
    %189 = vmatpush1.msra.mxu0 %v46
    %190 = vmatprep.subr.mxu0 0.0
    %191 = vmatpush1.msra.mxu0 %v47
    %192 = vmatprep.subr.mxu0 0.0
    %193 = vmatpush1.msra.mxu0 0.0
    %194 = vmatprep.subr.mxu0 0.0
    %195 = vmatpush1.msra.mxu0 0.0
    %196 = vmatprep.subr.mxu0 0.0
    %197 = vmatpush1.msra.mxu0 0.0
    %198 = vmatprep.subr.mxu0 0.0
    %199 = vmatpush1.msra.mxu0 0.0
    %200 = vmatprep.subr.mxu0 0.0
    %201 = vmatpush1.msra.mxu0 0.0
    %202 = vmatprep.subr.mxu0 0.0
    %203 = vmatpush1.msra.mxu0 0.0
    %204 = vmatprep.subr.mxu0 0.0
    %205 = vmatpush1.msra.mxu0 0.0
    %206 = vmatprep.subr.mxu0 0.0
    %207 = vmatpush1.msra.mxu0 0.0
    %208 = vmatprep.subr.mxu0 0.0
    %209 = vmatpush1.msra.mxu0 0.0
    %210 = vmatprep.subr.mxu0 0.0
    %211 = vmatpush1.msra.mxu0 0.0
    %212 = vmatprep.subr.mxu0 0.0
    %213 = vmatpush1.msra.mxu0 0.0
    %214 = vmatprep.subr.mxu0 0.0
    %215 = vmatpush1.msra.mxu0 0.0
    %216 = vmatprep.subr.mxu0 0.0
    %217 = vmatpush1.msra.mxu0 0.0
    %218 = vmatprep.subr.mxu0 0.0
    %219 = vmatpush1.msra.mxu0 0.0
    %220 = vmatprep.subr.mxu0 0.0
    %221 = vmatpush1.msra.mxu0 0.0
    %222 = vmatprep.subr.mxu0 0.0
    %223 = vmatpush1.msra.mxu0 0.0
    %224 = vmatprep.subr.mxu0 0.0
    %225 = vmatpush1.msra.mxu0 0.0
    %226 = vmatprep.subr.mxu0 0.0
    %227 = vmatpush1.msra.mxu0 0.0
    %228 = vmatprep.subr.mxu0 0.0
    %229 = vmatpush1.msra.mxu0 0.0
    %230 = vmatprep.subr.mxu0 0.0
    %231 = vmatpush1.msra.mxu0 0.0
    %232 = vmatprep.subr.mxu0 0.0
    %233 = vmatpush1.msra.mxu0 0.0
    %234 = vmatprep.subr.mxu0 0.0
    %235 = vmatpush1.msra.mxu0 0.0
    %236 = vmatprep.subr.mxu0 0.0
    %237 = vmatpush1.msra.mxu0 0.0
    %238 = vmatprep.subr.mxu0 0.0
    %239 = vmatpush1.msra.mxu0 0.0
    %240 = vmatprep.subr.mxu0 0.0
    %241 = vmatpush1.msra.mxu0 0.0
    %242 = vmatprep.subr.mxu0 0.0
    %243 = vmatpush1.msra.mxu0 0.0
    %244 = vmatprep.subr.mxu0 0.0
    %245 = vmatpush1.msra.mxu0 0.0
    %246 = vmatprep.subr.mxu0 0.0
    %247 = vmatpush1.msra.mxu0 0.0
    %248 = vmatprep.mubr.f32.mxu0 0.0
    %249 = vmatmul.mubr.f32.gmra.mrb[0].mxu0 %v89
    %v250 = vpop.f32.mrb[0].mxu0
    %v251 = vadd.f32 %v86, %v250
    %v252 = vpop.f32.mrb[0].mxu0
    %253 = vmatprep.mubr.f32.mxu0 0.0
    %254 = vmatmul.mubr.f32.gmra.mrb[0].mxu0 %v92
    %v255 = vpop.f32.mrb[0].mxu0
    %v256 = vadd.f32 %v86, %v255
    %v257 = vpop.f32.mrb[0].mxu0
    %258 = vmatprep.mubr.f32.mxu0 0.0
    %259 = vmatmul.mubr.f32.gmra.mrb[0].mxu0 %v95
    %v260 = vpop.f32.mrb[0].mxu0
    %v261 = vadd.f32 %v86, %v260
    %v262 = vpop.f32.mrb[0].mxu0
    %263 = vmatprep.mubr.f32.mxu0 0.0
    %264 = vmatmul.mubr.f32.gmra.mrb[0].mxu0 %v98
    %v265 = vpop.f32.mrb[0].mxu0
    %v266 = vadd.f32 %v86, %v265
    %v267 = vpop.f32.mrb[0].mxu0
    %268 = vmatprep.mubr.f32.mxu0 0.0
    %269 = vmatmul.mubr.f32.gmra.mrb[0].mxu0 %v101
    %v270 = vpop.f32.mrb[0].mxu0
    %v271 = vadd.f32 %v86, %v270
    %v272 = vpop.f32.mrb[0].mxu0
    %273 = vmatprep.mubr.f32.mxu0 0.0
    %274 = vmatmul.mubr.f32.gmra.mrb[0].mxu0 %v104
    %v275 = vpop.f32.mrb[0].mxu0
    %v276 = vadd.f32 %v86, %v275
    %v277 = vpop.f32.mrb[0].mxu0
    %278 = vmatprep.mubr.f32.mxu0 0.0
    %279 = vmatmul.mubr.f32.gmra.mrb[0].mxu0 %v107
    %v280 = vpop.f32.mrb[0].mxu0
    %v281 = vadd.f32 %v86, %v280
    %v282 = vpop.f32.mrb[0].mxu0
    %283 = vmatprep.mubr.f32.mxu0 0.0
    %284 = vmatmul.mubr.f32.gmra.mrb[0].mxu0 %v110
    %v285 = vpop.f32.mrb[0].mxu0
    %v286 = vadd.f32 %v86, %v285
    %v287 = vpop.f32.mrb[0].mxu0
    %288 = vmatprep.mubr.f32.mxu0 0.0
    %289 = vmatmul.mubr.f32.gmra.mrb[0].mxu0 %v113
    %v290 = vpop.f32.mrb[0].mxu0
    %v291 = vadd.f32 %v86, %v290
    %v292 = vpop.f32.mrb[0].mxu0
    %293 = vmatprep.mubr.f32.mxu0 0.0
    %294 = vmatmul.mubr.f32.gmra.mrb[0].mxu0 %v116
    %v295 = vpop.f32.mrb[0].mxu0
    %v296 = vadd.f32 %v86, %v295
    %v297 = vpop.f32.mrb[0].mxu0
    %298 = vmatprep.mubr.f32.mxu0 0.0
    %299 = vmatmul.mubr.f32.gmra.mrb[0].mxu0 %v119
    %v300 = vpop.f32.mrb[0].mxu0
    %v301 = vadd.f32 %v86, %v300
    %v302 = vpop.f32.mrb[0].mxu0
    %303 = vmatprep.mubr.f32.mxu0 0.0
    %304 = vmatmul.mubr.f32.gmra.mrb[0].mxu0 %v122
    %v305 = vpop.f32.mrb[0].mxu0
    %v306 = vadd.f32 %v86, %v305
    %v307 = vpop.f32.mrb[0].mxu0
    %308 = vmatprep.mubr.f32.mxu0 0.0
    %309 = vmatmul.mubr.f32.gmra.mrb[0].mxu0 %v125
    %v310 = vpop.f32.mrb[0].mxu0
    %v311 = vadd.f32 %v86, %v310
    %v312 = vpop.f32.mrb[0].mxu0
    %313 = vmatprep.mubr.f32.mxu0 0.0
    %314 = vmatmul.mubr.f32.gmra.mrb[0].mxu0 %v128
    %v315 = vpop.f32.mrb[0].mxu0
    %v316 = vadd.f32 %v86, %v315
    %v317 = vpop.f32.mrb[0].mxu0
    %318 = vmatprep.mubr.f32.mxu0 0.0
    %319 = vmatmul.mubr.f32.gmra.mrb[0].mxu0 %v131
    %v320 = vpop.f32.mrb[0].mxu0
    %v321 = vadd.f32 %v86, %v320
    %v322 = vpop.f32.mrb[0].mxu0
    %323 = vmatprep.mubr.f32.mxu0 0.0
    %324 = vmatmul.mubr.f32.gmra.mrb[0].mxu0 %v134
    %v325 = vpop.f32.mrb[0].mxu0
    %v326 = vadd.f32 %v86, %v325
    %v327 = vpop.f32.mrb[0].mxu0
    %328 = vmatprep.mubr.f32.mxu0 0.0
    %329 = vmatmul.mubr.f32.gmra.mrb[0].mxu0 %v137
    %v330 = vpop.f32.mrb[0].mxu0
    %v331 = vadd.f32 %v86, %v330
    %v332 = vpop.f32.mrb[0].mxu0
    %333 = vmatprep.mubr.f32.mxu0 0.0
    %334 = vmatmul.mubr.f32.gmra.mrb[0].mxu0 %v140
    %v335 = vpop.f32.mrb[0].mxu0
    %v336 = vadd.f32 %v86, %v335
    %v337 = vpop.f32.mrb[0].mxu0
    %338 = vmatprep.mubr.f32.mxu0 0.0
    %339 = vmatmul.mubr.f32.gmra.mrb[0].mxu0 %v143
    %v340 = vpop.f32.mrb[0].mxu0
    %v341 = vadd.f32 %v86, %v340
    %v342 = vpop.f32.mrb[0].mxu0
    %343 = vmatprep.mubr.f32.mxu0 0.0
    %344 = vmatmul.mubr.f32.gmra.mrb[0].mxu0 %v146
    %v345 = vpop.f32.mrb[0].mxu0
    %v346 = vadd.f32 %v86, %v345
    %v347 = vpop.f32.mrb[0].mxu0
    %348 = vmatprep.mubr.f32.mxu0 0.0
    %349 = vmatmul.mubr.f32.gmra.mrb[0].mxu0 %v149
    %v350 = vpop.f32.mrb[0].mxu0
    %v351 = vadd.f32 %v86, %v350
    %v352 = vpop.f32.mrb[0].mxu0
    %353 = vmatprep.mubr.f32.mxu0 0.0
    %354 = vmatmul.mubr.f32.gmra.mrb[0].mxu0 %v152
    %v355 = vpop.f32.mrb[0].mxu0
    %v356 = vadd.f32 %v86, %v355
    %v357 = vpop.f32.mrb[0].mxu0
    %358 = vmatprep.mubr.f32.mxu0 0.0
    %359 = vmatmul.mubr.f32.gmra.mrb[0].mxu0 %v155
    %v360 = vpop.f32.mrb[0].mxu0
    %v361 = vadd.f32 %v86, %v360
    %v362 = vpop.f32.mrb[0].mxu0
    %363 = vmatprep.mubr.f32.mxu0 0.0
    %364 = vmatmul.mubr.f32.gmra.mrb[0].mxu0 %v158
    %v365 = vpop.f32.mrb[0].mxu0
    %v366 = vadd.f32 %v86, %v365
    %v367 = vpop.f32.mrb[0].mxu0
    %368 = vmatprep.mubr.f32.mxu0 0.0
    %369 = vmatmul.mubr.f32.gmra.mrb[0].mxu0 %v161
    %v370 = vpop.f32.mrb[0].mxu0
    %v371 = vadd.f32 %v86, %v370
    %v372 = vpop.f32.mrb[0].mxu0
    %373 = vmatprep.mubr.f32.mxu0 0.0
    %374 = vmatmul.mubr.f32.gmra.mrb[0].mxu0 %v164
    %v375 = vpop.f32.mrb[0].mxu0
    %v376 = vadd.f32 %v86, %v375
    %v377 = vpop.f32.mrb[0].mxu0
    %378 = vmatprep.mubr.f32.mxu0 0.0
    %379 = vmatmul.mubr.f32.gmra.mrb[0].mxu0 %v167
    %v380 = vpop.f32.mrb[0].mxu0
    %v381 = vadd.f32 %v86, %v380
    %v382 = vpop.f32.mrb[0].mxu0
    %383 = vmatprep.mubr.f32.mxu0 0.0
    %384 = vmatmul.mubr.f32.gmra.mrb[0].mxu0 %v170
    %v385 = vpop.f32.mrb[0].mxu0
    %v386 = vadd.f32 %v86, %v385
    %v387 = vpop.f32.mrb[0].mxu0
    %388 = vmatprep.mubr.f32.mxu0 0.0
    %389 = vmatmul.mubr.f32.gmra.mrb[0].mxu0 %v173
    %v390 = vpop.f32.mrb[0].mxu0
    %v391 = vadd.f32 %v86, %v390
    %v392 = vpop.f32.mrb[0].mxu0
    %393 = vmatprep.mubr.f32.mxu0 0.0
    %394 = vmatmul.mubr.f32.gmra.mrb[0].mxu0 %v176
    %v395 = vpop.f32.mrb[0].mxu0
    %v396 = vadd.f32 %v86, %v395
    %v397 = vpop.f32.mrb[0].mxu0
    %398 = vmatprep.mubr.f32.mxu0 0.0
    %399 = vmatmul.mubr.f32.gmra.mrb[0].mxu0 %v179
    %v400 = vpop.f32.mrb[0].mxu0
    %v401 = vadd.f32 %v86, %v400
    %v402 = vpop.f32.mrb[0].mxu0
    %403 = vmatprep.mubr.f32.mxu0 0.0
    %404 = vmatmul.mubr.f32.gmra.mrb[0].mxu0 %v182
    %v405 = vpop.f32.mrb[0].mxu0
    %v406 = vadd.f32 %v86, %v405
    %v407 = vpop.f32.mrb[0].mxu0
    %408 = vdwg.mxu0
    %v409 = vmax.f32 %v251, 0.0
    %v410 = vmax.f32 %v256, 0.0
    %v411 = vmax.f32 %v261, 0.0
    %v412 = vmax.f32 %v266, 0.0
    %v413 = vmax.f32 %v271, 0.0
    %v414 = vmax.f32 %v276, 0.0
    %v415 = vmax.f32 %v281, 0.0
    %v416 = vmax.f32 %v286, 0.0
    %v417 = vmax.f32 %v291, 0.0
    %v418 = vmax.f32 %v296, 0.0
    %v419 = vmax.f32 %v301, 0.0
    %v420 = vmax.f32 %v306, 0.0
    %v421 = vmax.f32 %v311, 0.0
    %v422 = vmax.f32 %v316, 0.0
    %v423 = vmax.f32 %v321, 0.0
    %v424 = vmax.f32 %v326, 0.0
    %v425 = vmax.f32 %v331, 0.0
    %v426 = vmax.f32 %v336, 0.0
    %v427 = vmax.f32 %v341, 0.0
    %v428 = vmax.f32 %v346, 0.0
    %v429 = vmax.f32 %v351, 0.0
    %v430 = vmax.f32 %v356, 0.0
    %v431 = vmax.f32 %v361, 0.0
    %v432 = vmax.f32 %v366, 0.0
    %v433 = vmax.f32 %v371, 0.0
    %v434 = vmax.f32 %v376, 0.0
    %v435 = vmax.f32 %v381, 0.0
    %v436 = vmax.f32 %v386, 0.0
    %v437 = vmax.f32 %v391, 0.0
    %v438 = vmax.f32 %v396, 0.0
    %v439 = vmax.f32 %v401, 0.0
    %v440 = vmax.f32 %v406, 0.0
    %v441 = vlaneseq
    %v442 = vshrl.u32 %v441, 7
    %v443 = vsub.s32 0, %v442
    %v444 = vrot.slane %v81, %v443
    %445 = vmatprep.subr.mxu0 0.0
    %446 = vmatpush1.msra.mxu0 %v48
    %447 = vmatprep.subr.mxu0 0.0
    %448 = vmatpush1.msra.mxu0 %v49
    %449 = vmatprep.subr.mxu0 0.0
    %450 = vmatpush1.msra.mxu0 %v50
    %451 = vmatprep.subr.mxu0 0.0
    %452 = vmatpush1.msra.mxu0 %v51
    %453 = vmatprep.subr.mxu0 0.0
    %454 = vmatpush1.msra.mxu0 %v52
    %455 = vmatprep.subr.mxu0 0.0
    %456 = vmatpush1.msra.mxu0 %v53
    %457 = vmatprep.subr.mxu0 0.0
    %458 = vmatpush1.msra.mxu0 %v54
    %459 = vmatprep.subr.mxu0 0.0
    %460 = vmatpush1.msra.mxu0 %v55
    %461 = vmatprep.subr.mxu0 0.0
    %462 = vmatpush1.msra.mxu0 %v56
    %463 = vmatprep.subr.mxu0 0.0
    %464 = vmatpush1.msra.mxu0 %v57
    %465 = vmatprep.subr.mxu0 0.0
    %466 = vmatpush1.msra.mxu0 %v58
    %467 = vmatprep.subr.mxu0 0.0
    %468 = vmatpush1.msra.mxu0 %v59
    %469 = vmatprep.subr.mxu0 0.0
    %470 = vmatpush1.msra.mxu0 %v60
    %471 = vmatprep.subr.mxu0 0.0
    %472 = vmatpush1.msra.mxu0 %v61
    %473 = vmatprep.subr.mxu0 0.0
    %474 = vmatpush1.msra.mxu0 %v62
    %475 = vmatprep.subr.mxu0 0.0
    %476 = vmatpush1.msra.mxu0 %v63
    %477 = vmatprep.subr.mxu0 0.0
    %478 = vmatpush1.msra.mxu0 0.0
    %479 = vmatprep.subr.mxu0 0.0
    %480 = vmatpush1.msra.mxu0 0.0
    %481 = vmatprep.subr.mxu0 0.0
    %482 = vmatpush1.msra.mxu0 0.0
    %483 = vmatprep.subr.mxu0 0.0
    %484 = vmatpush1.msra.mxu0 0.0
    %485 = vmatprep.subr.mxu0 0.0
    %486 = vmatpush1.msra.mxu0 0.0
    %487 = vmatprep.subr.mxu0 0.0
    %488 = vmatpush1.msra.mxu0 0.0
    %489 = vmatprep.subr.mxu0 0.0
    %490 = vmatpush1.msra.mxu0 0.0
    %491 = vmatprep.subr.mxu0 0.0
    %492 = vmatpush1.msra.mxu0 0.0
    %493 = vmatprep.subr.mxu0 0.0
    %494 = vmatpush1.msra.mxu0 0.0
    %495 = vmatprep.subr.mxu0 0.0
    %496 = vmatpush1.msra.mxu0 0.0
    %497 = vmatprep.subr.mxu0 0.0
    %498 = vmatpush1.msra.mxu0 0.0
    %499 = vmatprep.subr.mxu0 0.0
    %500 = vmatpush1.msra.mxu0 0.0
    %501 = vmatprep.subr.mxu0 0.0
    %502 = vmatpush1.msra.mxu0 0.0
    %503 = vmatprep.subr.mxu0 0.0
    %504 = vmatpush1.msra.mxu0 0.0
    %505 = vmatprep.subr.mxu0 0.0
    %506 = vmatpush1.msra.mxu0 0.0
    %507 = vmatprep.subr.mxu0 0.0
    %508 = vmatpush1.msra.mxu0 0.0
    %509 = vmatprep.mubr.f32.mxu0 0.0
    %510 = vmatmul.mubr.f32.gmra.mrb[0].mxu0 %v409
    %v511 = vpop.f32.mrb[0].mxu0
    %v512 = vadd.f32 %v444, %v511
    %v513 = vpop.f32.mrb[0].mxu0
    %514 = vmatprep.mubr.f32.mxu0 0.0
    %515 = vmatmul.mubr.f32.gmra.mrb[0].mxu0 %v410
    %v516 = vpop.f32.mrb[0].mxu0
    %v517 = vadd.f32 %v444, %v516
    %v518 = vpop.f32.mrb[0].mxu0
    %519 = vmatprep.mubr.f32.mxu0 0.0
    %520 = vmatmul.mubr.f32.gmra.mrb[0].mxu0 %v411
    %v521 = vpop.f32.mrb[0].mxu0
    %v522 = vadd.f32 %v444, %v521
    %v523 = vpop.f32.mrb[0].mxu0
    %524 = vmatprep.mubr.f32.mxu0 0.0
    %525 = vmatmul.mubr.f32.gmra.mrb[0].mxu0 %v412
    %v526 = vpop.f32.mrb[0].mxu0
    %v527 = vadd.f32 %v444, %v526
    %v528 = vpop.f32.mrb[0].mxu0
    %529 = vmatprep.mubr.f32.mxu0 0.0
    %530 = vmatmul.mubr.f32.gmra.mrb[0].mxu0 %v413
    %v531 = vpop.f32.mrb[0].mxu0
    %v532 = vadd.f32 %v444, %v531
    %v533 = vpop.f32.mrb[0].mxu0
    %534 = vmatprep.mubr.f32.mxu0 0.0
    %535 = vmatmul.mubr.f32.gmra.mrb[0].mxu0 %v414
    %v536 = vpop.f32.mrb[0].mxu0
    %v537 = vadd.f32 %v444, %v536
    %v538 = vpop.f32.mrb[0].mxu0
    %539 = vmatprep.mubr.f32.mxu0 0.0
    %540 = vmatmul.mubr.f32.gmra.mrb[0].mxu0 %v415
    %v541 = vpop.f32.mrb[0].mxu0
    %v542 = vadd.f32 %v444, %v541
    %v543 = vpop.f32.mrb[0].mxu0
    %544 = vmatprep.mubr.f32.mxu0 0.0
    %545 = vmatmul.mubr.f32.gmra.mrb[0].mxu0 %v416
    %v546 = vpop.f32.mrb[0].mxu0
    %v547 = vadd.f32 %v444, %v546
    %v548 = vpop.f32.mrb[0].mxu0
    %549 = vmatprep.mubr.f32.mxu0 0.0
    %550 = vmatmul.mubr.f32.gmra.mrb[0].mxu0 %v417
    %v551 = vpop.f32.mrb[0].mxu0
    %v552 = vadd.f32 %v444, %v551
    %v553 = vpop.f32.mrb[0].mxu0
    %554 = vmatprep.mubr.f32.mxu0 0.0
    %555 = vmatmul.mubr.f32.gmra.mrb[0].mxu0 %v418
    %v556 = vpop.f32.mrb[0].mxu0
    %v557 = vadd.f32 %v444, %v556
    %v558 = vpop.f32.mrb[0].mxu0
    %559 = vmatprep.mubr.f32.mxu0 0.0
    %560 = vmatmul.mubr.f32.gmra.mrb[0].mxu0 %v419
    %v561 = vpop.f32.mrb[0].mxu0
    %v562 = vadd.f32 %v444, %v561
    %v563 = vpop.f32.mrb[0].mxu0
    %564 = vmatprep.mubr.f32.mxu0 0.0
    %565 = vmatmul.mubr.f32.gmra.mrb[0].mxu0 %v420
    %v566 = vpop.f32.mrb[0].mxu0
    %v567 = vadd.f32 %v444, %v566
    %v568 = vpop.f32.mrb[0].mxu0
    %569 = vmatprep.mubr.f32.mxu0 0.0
    %570 = vmatmul.mubr.f32.gmra.mrb[0].mxu0 %v421
    %v571 = vpop.f32.mrb[0].mxu0
    %v572 = vadd.f32 %v444, %v571
    %v573 = vpop.f32.mrb[0].mxu0
    %574 = vmatprep.mubr.f32.mxu0 0.0
    %575 = vmatmul.mubr.f32.gmra.mrb[0].mxu0 %v422
    %v576 = vpop.f32.mrb[0].mxu0
    %v577 = vadd.f32 %v444, %v576
    %v578 = vpop.f32.mrb[0].mxu0
    %579 = vmatprep.mubr.f32.mxu0 0.0
    %580 = vmatmul.mubr.f32.gmra.mrb[0].mxu0 %v423
    %v581 = vpop.f32.mrb[0].mxu0
    %v582 = vadd.f32 %v444, %v581
    %v583 = vpop.f32.mrb[0].mxu0
    %584 = vmatprep.mubr.f32.mxu0 0.0
    %585 = vmatmul.mubr.f32.gmra.mrb[0].mxu0 %v424
    %v586 = vpop.f32.mrb[0].mxu0
    %v587 = vadd.f32 %v444, %v586
    %v588 = vpop.f32.mrb[0].mxu0
    %589 = vmatprep.mubr.f32.mxu0 0.0
    %590 = vmatmul.mubr.f32.gmra.mrb[0].mxu0 %v425
    %v591 = vpop.f32.mrb[0].mxu0
    %v592 = vadd.f32 %v444, %v591
    %v593 = vpop.f32.mrb[0].mxu0
    %594 = vmatprep.mubr.f32.mxu0 0.0
    %595 = vmatmul.mubr.f32.gmra.mrb[0].mxu0 %v426
    %v596 = vpop.f32.mrb[0].mxu0
    %v597 = vadd.f32 %v444, %v596
    %v598 = vpop.f32.mrb[0].mxu0
    %599 = vmatprep.mubr.f32.mxu0 0.0
    %600 = vmatmul.mubr.f32.gmra.mrb[0].mxu0 %v427
    %v601 = vpop.f32.mrb[0].mxu0
    %v602 = vadd.f32 %v444, %v601
    %v603 = vpop.f32.mrb[0].mxu0
    %604 = vmatprep.mubr.f32.mxu0 0.0
    %605 = vmatmul.mubr.f32.gmra.mrb[0].mxu0 %v428
    %v606 = vpop.f32.mrb[0].mxu0
    %v607 = vadd.f32 %v444, %v606
    %v608 = vpop.f32.mrb[0].mxu0
    %609 = vmatprep.mubr.f32.mxu0 0.0
    %610 = vmatmul.mubr.f32.gmra.mrb[0].mxu0 %v429
    %v611 = vpop.f32.mrb[0].mxu0
    %v612 = vadd.f32 %v444, %v611
    %v613 = vpop.f32.mrb[0].mxu0
    %614 = vmatprep.mubr.f32.mxu0 0.0
    %615 = vmatmul.mubr.f32.gmra.mrb[0].mxu0 %v430
    %v616 = vpop.f32.mrb[0].mxu0
    %v617 = vadd.f32 %v444, %v616
    %v618 = vpop.f32.mrb[0].mxu0
    %619 = vmatprep.mubr.f32.mxu0 0.0
    %620 = vmatmul.mubr.f32.gmra.mrb[0].mxu0 %v431
    %v621 = vpop.f32.mrb[0].mxu0
    %v622 = vadd.f32 %v444, %v621
    %v623 = vpop.f32.mrb[0].mxu0
    %624 = vmatprep.mubr.f32.mxu0 0.0
    %625 = vmatmul.mubr.f32.gmra.mrb[0].mxu0 %v432
    %v626 = vpop.f32.mrb[0].mxu0
    %v627 = vadd.f32 %v444, %v626
    %v628 = vpop.f32.mrb[0].mxu0
    %629 = vmatprep.mubr.f32.mxu0 0.0
    %630 = vmatmul.mubr.f32.gmra.mrb[0].mxu0 %v433
    %v631 = vpop.f32.mrb[0].mxu0
    %v632 = vadd.f32 %v444, %v631
    %v633 = vpop.f32.mrb[0].mxu0
    %634 = vmatprep.mubr.f32.mxu0 0.0
    %635 = vmatmul.mubr.f32.gmra.mrb[0].mxu0 %v434
    %v636 = vpop.f32.mrb[0].mxu0
    %v637 = vadd.f32 %v444, %v636
    %v638 = vpop.f32.mrb[0].mxu0
    %639 = vmatprep.mubr.f32.mxu0 0.0
    %640 = vmatmul.mubr.f32.gmra.mrb[0].mxu0 %v435
    %v641 = vpop.f32.mrb[0].mxu0
    %v642 = vadd.f32 %v444, %v641
    %v643 = vpop.f32.mrb[0].mxu0
    %644 = vmatprep.mubr.f32.mxu0 0.0
    %645 = vmatmul.mubr.f32.gmra.mrb[0].mxu0 %v436
    %v646 = vpop.f32.mrb[0].mxu0
    %v647 = vadd.f32 %v444, %v646
    %v648 = vpop.f32.mrb[0].mxu0
    %649 = vmatprep.mubr.f32.mxu0 0.0
    %650 = vmatmul.mubr.f32.gmra.mrb[0].mxu0 %v437
    %v651 = vpop.f32.mrb[0].mxu0
    %v652 = vadd.f32 %v444, %v651
    %v653 = vpop.f32.mrb[0].mxu0
    %654 = vmatprep.mubr.f32.mxu0 0.0
    %655 = vmatmul.mubr.f32.gmra.mrb[0].mxu0 %v438
    %v656 = vpop.f32.mrb[0].mxu0
    %v657 = vadd.f32 %v444, %v656
    %v658 = vpop.f32.mrb[0].mxu0
    %659 = vmatprep.mubr.f32.mxu0 0.0
    %660 = vmatmul.mubr.f32.gmra.mrb[0].mxu0 %v439
    %v661 = vpop.f32.mrb[0].mxu0
    %v662 = vadd.f32 %v444, %v661
    %v663 = vpop.f32.mrb[0].mxu0
    %664 = vmatprep.mubr.f32.mxu0 0.0
    %665 = vmatmul.mubr.f32.gmra.mrb[0].mxu0 %v440
    %v666 = vpop.f32.mrb[0].mxu0
    %v667 = vadd.f32 %v444, %v666
    %v668 = vpop.f32.mrb[0].mxu0
    %669 = vdwg.mxu0
    %v670 = vmax.f32 %v512, 0.0
    %v671 = vmax.f32 %v517, 0.0
    %v672 = vmax.f32 %v522, 0.0
    %v673 = vmax.f32 %v527, 0.0
    %v674 = vmax.f32 %v532, 0.0
    %v675 = vmax.f32 %v537, 0.0
    %v676 = vmax.f32 %v542, 0.0
    %v677 = vmax.f32 %v547, 0.0
    %v678 = vmax.f32 %v552, 0.0
    %v679 = vmax.f32 %v557, 0.0
    %v680 = vmax.f32 %v562, 0.0
    %v681 = vmax.f32 %v567, 0.0
    %v682 = vmax.f32 %v572, 0.0
    %v683 = vmax.f32 %v577, 0.0
    %v684 = vmax.f32 %v582, 0.0
    %v685 = vmax.f32 %v587, 0.0
    %v686 = vmax.f32 %v592, 0.0
    %v687 = vmax.f32 %v597, 0.0
    %v688 = vmax.f32 %v602, 0.0
    %v689 = vmax.f32 %v607, 0.0
    %v690 = vmax.f32 %v612, 0.0
    %v691 = vmax.f32 %v617, 0.0
    %v692 = vmax.f32 %v622, 0.0
    %v693 = vmax.f32 %v627, 0.0
    %v694 = vmax.f32 %v632, 0.0
    %v695 = vmax.f32 %v637, 0.0
    %v696 = vmax.f32 %v642, 0.0
    %v697 = vmax.f32 %v647, 0.0
    %v698 = vmax.f32 %v652, 0.0
    %v699 = vmax.f32 %v657, 0.0
    %v700 = vmax.f32 %v662, 0.0
    %v701 = vmax.f32 %v667, 0.0
    %v702 = vlaneseq
    %v703 = vshrl.u32 %v702, 7
    %v704 = vsub.s32 0, %v703
    %v705 = vrot.slane %v82, %v704
    %706 = vmatprep.subr.mxu0 0.0
    %707 = vmatpush1.msra.mxu0 %v64
    %708 = vmatprep.subr.mxu0 0.0
    %709 = vmatpush1.msra.mxu0 %v65
    %710 = vmatprep.subr.mxu0 0.0
    %711 = vmatpush1.msra.mxu0 %v66
    %712 = vmatprep.subr.mxu0 0.0
    %713 = vmatpush1.msra.mxu0 %v67
    %714 = vmatprep.subr.mxu0 0.0
    %715 = vmatpush1.msra.mxu0 %v68
    %716 = vmatprep.subr.mxu0 0.0
    %717 = vmatpush1.msra.mxu0 %v69
    %718 = vmatprep.subr.mxu0 0.0
    %719 = vmatpush1.msra.mxu0 %v70
    %720 = vmatprep.subr.mxu0 0.0
    %721 = vmatpush1.msra.mxu0 %v71
    %722 = vmatprep.subr.mxu0 0.0
    %723 = vmatpush1.msra.mxu0 %v72
    %724 = vmatprep.subr.mxu0 0.0
    %725 = vmatpush1.msra.mxu0 %v73
    %726 = vmatprep.subr.mxu0 0.0
    %727 = vmatpush1.msra.mxu0 %v74
    %728 = vmatprep.subr.mxu0 0.0
    %729 = vmatpush1.msra.mxu0 %v75
    %730 = vmatprep.subr.mxu0 0.0
    %731 = vmatpush1.msra.mxu0 %v76
    %732 = vmatprep.subr.mxu0 0.0
    %733 = vmatpush1.msra.mxu0 %v77
    %734 = vmatprep.subr.mxu0 0.0
    %735 = vmatpush1.msra.mxu0 %v78
    %736 = vmatprep.subr.mxu0 0.0
    %737 = vmatpush1.msra.mxu0 %v79
    %738 = vmatprep.subr.mxu0 0.0
    %739 = vmatpush1.msra.mxu0 0.0
    %740 = vmatprep.subr.mxu0 0.0
    %741 = vmatpush1.msra.mxu0 0.0
    %742 = vmatprep.subr.mxu0 0.0
    %743 = vmatpush1.msra.mxu0 0.0
    %744 = vmatprep.subr.mxu0 0.0
    %745 = vmatpush1.msra.mxu0 0.0
    %746 = vmatprep.subr.mxu0 0.0
    %747 = vmatpush1.msra.mxu0 0.0
    %748 = vmatprep.subr.mxu0 0.0
    %749 = vmatpush1.msra.mxu0 0.0
    %750 = vmatprep.subr.mxu0 0.0
    %751 = vmatpush1.msra.mxu0 0.0
    %752 = vmatprep.subr.mxu0 0.0
    %753 = vmatpush1.msra.mxu0 0.0
    %754 = vmatprep.subr.mxu0 0.0
    %755 = vmatpush1.msra.mxu0 0.0
    %756 = vmatprep.subr.mxu0 0.0
    %757 = vmatpush1.msra.mxu0 0.0
    %758 = vmatprep.subr.mxu0 0.0
    %759 = vmatpush1.msra.mxu0 0.0
    %760 = vmatprep.subr.mxu0 0.0
    %761 = vmatpush1.msra.mxu0 0.0
    %762 = vmatprep.subr.mxu0 0.0
    %763 = vmatpush1.msra.mxu0 0.0
    %764 = vmatprep.subr.mxu0 0.0
    %765 = vmatpush1.msra.mxu0 0.0
    %766 = vmatprep.subr.mxu0 0.0
    %767 = vmatpush1.msra.mxu0 0.0
    %768 = vmatprep.subr.mxu0 0.0
    %769 = vmatpush1.msra.mxu0 0.0
    %770 = vmatprep.mubr.f32.mxu0 0.0
    %771 = vmatmul.mubr.f32.gmra.mrb[0].mxu0 %v670
    %v772 = vpop.f32.mrb[0].mxu0
    %v773 = vadd.f32 %v705, %v772
    %v774 = vpop.f32.mrb[0].mxu0
    %775 = vmatprep.mubr.f32.mxu0 0.0
    %776 = vmatmul.mubr.f32.gmra.mrb[0].mxu0 %v671
    %v777 = vpop.f32.mrb[0].mxu0
    %v778 = vadd.f32 %v705, %v777
    %v779 = vpop.f32.mrb[0].mxu0
    %780 = vmatprep.mubr.f32.mxu0 0.0
    %781 = vmatmul.mubr.f32.gmra.mrb[0].mxu0 %v672
    %v782 = vpop.f32.mrb[0].mxu0
    %v783 = vadd.f32 %v705, %v782
    %v784 = vpop.f32.mrb[0].mxu0
    %785 = vmatprep.mubr.f32.mxu0 0.0
    %786 = vmatmul.mubr.f32.gmra.mrb[0].mxu0 %v673
    %v787 = vpop.f32.mrb[0].mxu0
    %v788 = vadd.f32 %v705, %v787
    %v789 = vpop.f32.mrb[0].mxu0
    %790 = vmatprep.mubr.f32.mxu0 0.0
    %791 = vmatmul.mubr.f32.gmra.mrb[0].mxu0 %v674
    %v792 = vpop.f32.mrb[0].mxu0
    %v793 = vadd.f32 %v705, %v792
    %v794 = vpop.f32.mrb[0].mxu0
    %795 = vmatprep.mubr.f32.mxu0 0.0
    %796 = vmatmul.mubr.f32.gmra.mrb[0].mxu0 %v675
    %v797 = vpop.f32.mrb[0].mxu0
    %v798 = vadd.f32 %v705, %v797
    %v799 = vpop.f32.mrb[0].mxu0
    %800 = vmatprep.mubr.f32.mxu0 0.0
    %801 = vmatmul.mubr.f32.gmra.mrb[0].mxu0 %v676
    %v802 = vpop.f32.mrb[0].mxu0
    %v803 = vadd.f32 %v705, %v802
    %v804 = vpop.f32.mrb[0].mxu0
    %805 = vmatprep.mubr.f32.mxu0 0.0
    %806 = vmatmul.mubr.f32.gmra.mrb[0].mxu0 %v677
    %v807 = vpop.f32.mrb[0].mxu0
    %v808 = vadd.f32 %v705, %v807
    %v809 = vpop.f32.mrb[0].mxu0
    %810 = vmatprep.mubr.f32.mxu0 0.0
    %811 = vmatmul.mubr.f32.gmra.mrb[0].mxu0 %v678
    %v812 = vpop.f32.mrb[0].mxu0
    %v813 = vadd.f32 %v705, %v812
    %v814 = vpop.f32.mrb[0].mxu0
    %815 = vmatprep.mubr.f32.mxu0 0.0
    %816 = vmatmul.mubr.f32.gmra.mrb[0].mxu0 %v679
    %v817 = vpop.f32.mrb[0].mxu0
    %v818 = vadd.f32 %v705, %v817
    %v819 = vpop.f32.mrb[0].mxu0
    %820 = vmatprep.mubr.f32.mxu0 0.0
    %821 = vmatmul.mubr.f32.gmra.mrb[0].mxu0 %v680
    %v822 = vpop.f32.mrb[0].mxu0
    %v823 = vadd.f32 %v705, %v822
    %v824 = vpop.f32.mrb[0].mxu0
    %825 = vmatprep.mubr.f32.mxu0 0.0
    %826 = vmatmul.mubr.f32.gmra.mrb[0].mxu0 %v681
    %v827 = vpop.f32.mrb[0].mxu0
    %v828 = vadd.f32 %v705, %v827
    %v829 = vpop.f32.mrb[0].mxu0
    %830 = vmatprep.mubr.f32.mxu0 0.0
    %831 = vmatmul.mubr.f32.gmra.mrb[0].mxu0 %v682
    %v832 = vpop.f32.mrb[0].mxu0
    %v833 = vadd.f32 %v705, %v832
    %v834 = vpop.f32.mrb[0].mxu0
    %835 = vmatprep.mubr.f32.mxu0 0.0
    %836 = vmatmul.mubr.f32.gmra.mrb[0].mxu0 %v683
    %v837 = vpop.f32.mrb[0].mxu0
    %v838 = vadd.f32 %v705, %v837
    %v839 = vpop.f32.mrb[0].mxu0
    %840 = vmatprep.mubr.f32.mxu0 0.0
    %841 = vmatmul.mubr.f32.gmra.mrb[0].mxu0 %v684
    %v842 = vpop.f32.mrb[0].mxu0
    %v843 = vadd.f32 %v705, %v842
    %v844 = vpop.f32.mrb[0].mxu0
    %845 = vmatprep.mubr.f32.mxu0 0.0
    %846 = vmatmul.mubr.f32.gmra.mrb[0].mxu0 %v685
    %v847 = vpop.f32.mrb[0].mxu0
    %v848 = vadd.f32 %v705, %v847
    %v849 = vpop.f32.mrb[0].mxu0
    %850 = vmatprep.mubr.f32.mxu0 0.0
    %851 = vmatmul.mubr.f32.gmra.mrb[0].mxu0 %v686
    %v852 = vpop.f32.mrb[0].mxu0
    %v853 = vadd.f32 %v705, %v852
    %v854 = vpop.f32.mrb[0].mxu0
    %855 = vmatprep.mubr.f32.mxu0 0.0
    %856 = vmatmul.mubr.f32.gmra.mrb[0].mxu0 %v687
    %v857 = vpop.f32.mrb[0].mxu0
    %v858 = vadd.f32 %v705, %v857
    %v859 = vpop.f32.mrb[0].mxu0
    %860 = vmatprep.mubr.f32.mxu0 0.0
    %861 = vmatmul.mubr.f32.gmra.mrb[0].mxu0 %v688
    %v862 = vpop.f32.mrb[0].mxu0
    %v863 = vadd.f32 %v705, %v862
    %v864 = vpop.f32.mrb[0].mxu0
    %865 = vmatprep.mubr.f32.mxu0 0.0
    %866 = vmatmul.mubr.f32.gmra.mrb[0].mxu0 %v689
    %v867 = vpop.f32.mrb[0].mxu0
    %v868 = vadd.f32 %v705, %v867
    %v869 = vpop.f32.mrb[0].mxu0
    %870 = vmatprep.mubr.f32.mxu0 0.0
    %871 = vmatmul.mubr.f32.gmra.mrb[0].mxu0 %v690
    %v872 = vpop.f32.mrb[0].mxu0
    %v873 = vadd.f32 %v705, %v872
    %v874 = vpop.f32.mrb[0].mxu0
    %875 = vmatprep.mubr.f32.mxu0 0.0
    %876 = vmatmul.mubr.f32.gmra.mrb[0].mxu0 %v691
    %v877 = vpop.f32.mrb[0].mxu0
    %v878 = vadd.f32 %v705, %v877
    %v879 = vpop.f32.mrb[0].mxu0
    %880 = vmatprep.mubr.f32.mxu0 0.0
    %881 = vmatmul.mubr.f32.gmra.mrb[0].mxu0 %v692
    %v882 = vpop.f32.mrb[0].mxu0
    %v883 = vadd.f32 %v705, %v882
    %v884 = vpop.f32.mrb[0].mxu0
    %885 = vmatprep.mubr.f32.mxu0 0.0
    %886 = vmatmul.mubr.f32.gmra.mrb[0].mxu0 %v693
    %v887 = vpop.f32.mrb[0].mxu0
    %v888 = vadd.f32 %v705, %v887
    %v889 = vpop.f32.mrb[0].mxu0
    %890 = vmatprep.mubr.f32.mxu0 0.0
    %891 = vmatmul.mubr.f32.gmra.mrb[0].mxu0 %v694
    %v892 = vpop.f32.mrb[0].mxu0
    %v893 = vadd.f32 %v705, %v892
    %v894 = vpop.f32.mrb[0].mxu0
    %895 = vmatprep.mubr.f32.mxu0 0.0
    %896 = vmatmul.mubr.f32.gmra.mrb[0].mxu0 %v695
    %v897 = vpop.f32.mrb[0].mxu0
    %v898 = vadd.f32 %v705, %v897
    %v899 = vpop.f32.mrb[0].mxu0
    %900 = vmatprep.mubr.f32.mxu0 0.0
    %901 = vmatmul.mubr.f32.gmra.mrb[0].mxu0 %v696
    %v902 = vpop.f32.mrb[0].mxu0
    %v903 = vadd.f32 %v705, %v902
    %v904 = vpop.f32.mrb[0].mxu0
    %905 = vmatprep.mubr.f32.mxu0 0.0
    %906 = vmatmul.mubr.f32.gmra.mrb[0].mxu0 %v697
    %v907 = vpop.f32.mrb[0].mxu0
    %v908 = vadd.f32 %v705, %v907
    %v909 = vpop.f32.mrb[0].mxu0
    %910 = vmatprep.mubr.f32.mxu0 0.0
    %911 = vmatmul.mubr.f32.gmra.mrb[0].mxu0 %v698
    %v912 = vpop.f32.mrb[0].mxu0
    %v913 = vadd.f32 %v705, %v912
    %v914 = vpop.f32.mrb[0].mxu0
    %915 = vmatprep.mubr.f32.mxu0 0.0
    %916 = vmatmul.mubr.f32.gmra.mrb[0].mxu0 %v699
    %v917 = vpop.f32.mrb[0].mxu0
    %v918 = vadd.f32 %v705, %v917
    %v919 = vpop.f32.mrb[0].mxu0
    %920 = vmatprep.mubr.f32.mxu0 0.0
    %921 = vmatmul.mubr.f32.gmra.mrb[0].mxu0 %v700
    %v922 = vpop.f32.mrb[0].mxu0
    %v923 = vadd.f32 %v705, %v922
    %v924 = vpop.f32.mrb[0].mxu0
    %925 = vmatprep.mubr.f32.mxu0 0.0
    %926 = vmatmul.mubr.f32.gmra.mrb[0].mxu0 %v701
    %v927 = vpop.f32.mrb[0].mxu0
    %v928 = vadd.f32 %v705, %v927
    %v929 = vpop.f32.mrb[0].mxu0
    %930 = vdwg.mxu0
    %v931 = vxor.u32 %v773, 2147483648
    %v932 = vxor.u32 %v778, 2147483648
    %v933 = vxor.u32 %v783, 2147483648
    %v934 = vxor.u32 %v788, 2147483648
    %v935 = vxor.u32 %v793, 2147483648
    %v936 = vxor.u32 %v798, 2147483648
    %v937 = vxor.u32 %v803, 2147483648
    %v938 = vxor.u32 %v808, 2147483648
    %v939 = vxor.u32 %v813, 2147483648
    %v940 = vxor.u32 %v818, 2147483648
    %v941 = vxor.u32 %v823, 2147483648
    %v942 = vxor.u32 %v828, 2147483648
    %v943 = vxor.u32 %v833, 2147483648
    %v944 = vxor.u32 %v838, 2147483648
    %v945 = vxor.u32 %v843, 2147483648
    %v946 = vxor.u32 %v848, 2147483648
    %v947 = vxor.u32 %v853, 2147483648
    %v948 = vxor.u32 %v858, 2147483648
    %v949 = vxor.u32 %v863, 2147483648
    %v950 = vxor.u32 %v868, 2147483648
    %v951 = vxor.u32 %v873, 2147483648
    %v952 = vxor.u32 %v878, 2147483648
    %v953 = vxor.u32 %v883, 2147483648
    %v954 = vxor.u32 %v888, 2147483648
    %v955 = vxor.u32 %v893, 2147483648
    %v956 = vxor.u32 %v898, 2147483648
    %v957 = vxor.u32 %v903, 2147483648
    %v958 = vxor.u32 %v908, 2147483648
    %v959 = vxor.u32 %v913, 2147483648
    %v960 = vxor.u32 %v918, 2147483648
    %v961 = vxor.u32 %v923, 2147483648
    %v962 = vxor.u32 %v928, 2147483648
    %v963 = vmul.f32 %v931, 1.442695
    %v964 = vpow.pop %v963
    %v965 = vmul.f32 %v932, 1.442695
    %v966 = vpow.pop %v965
    %v967 = vmul.f32 %v933, 1.442695
    %v968 = vpow.pop %v967
    %v969 = vmul.f32 %v934, 1.442695
    %v970 = vpow.pop %v969
    %v971 = vmul.f32 %v935, 1.442695
    %v972 = vpow.pop %v971
    %v973 = vmul.f32 %v936, 1.442695
    %v974 = vpow.pop %v973
    %v975 = vmul.f32 %v937, 1.442695
    %v976 = vpow.pop %v975
    %v977 = vmul.f32 %v938, 1.442695
    %v978 = vpow.pop %v977
    %v979 = vmul.f32 %v939, 1.442695
    %v980 = vpow.pop %v979
    %v981 = vmul.f32 %v940, 1.442695
    %v982 = vpow.pop %v981
    %v983 = vmul.f32 %v941, 1.442695
    %v984 = vpow.pop %v983
    %v985 = vmul.f32 %v942, 1.442695
    %v986 = vpow.pop %v985
    %v987 = vmul.f32 %v943, 1.442695
    %v988 = vpow.pop %v987
    %v989 = vmul.f32 %v944, 1.442695
    %v990 = vpow.pop %v989
    %v991 = vmul.f32 %v945, 1.442695
    %v992 = vpow.pop %v991
    %v993 = vmul.f32 %v946, 1.442695
    %v994 = vpow.pop %v993
    %v995 = vmul.f32 %v947, 1.442695
    %v996 = vpow.pop %v995
    %v997 = vmul.f32 %v948, 1.442695
    %v998 = vpow.pop %v997
    %v999 = vmul.f32 %v949, 1.442695
    %v1000 = vpow.pop %v999
    %v1001 = vmul.f32 %v950, 1.442695
    %v1002 = vpow.pop %v1001
    %v1003 = vmul.f32 %v951, 1.442695
    %v1004 = vpow.pop %v1003
    %v1005 = vmul.f32 %v952, 1.442695
    %v1006 = vpow.pop %v1005
    %v1007 = vmul.f32 %v953, 1.442695
    %v1008 = vpow.pop %v1007
    %v1009 = vmul.f32 %v954, 1.442695
    %v1010 = vpow.pop %v1009
    %v1011 = vmul.f32 %v955, 1.442695
    %v1012 = vpow.pop %v1011
    %v1013 = vmul.f32 %v956, 1.442695
    %v1014 = vpow.pop %v1013
    %v1015 = vmul.f32 %v957, 1.442695
    %v1016 = vpow.pop %v1015
    %v1017 = vmul.f32 %v958, 1.442695
    %v1018 = vpow.pop %v1017
    %v1019 = vmul.f32 %v959, 1.442695
    %v1020 = vpow.pop %v1019
    %v1021 = vmul.f32 %v960, 1.442695
    %v1022 = vpow.pop %v1021
    %v1023 = vmul.f32 %v961, 1.442695
    %v1024 = vpow.pop %v1023
    %v1025 = vmul.f32 %v962, 1.442695
    %v1026 = vpow.pop %v1025
    %v1027 = vadd.f32 %v964, 1.0
    %v1028 = vadd.f32 %v966, 1.0
    %v1029 = vadd.f32 %v968, 1.0
    %v1030 = vadd.f32 %v970, 1.0
    %v1031 = vadd.f32 %v972, 1.0
    %v1032 = vadd.f32 %v974, 1.0
    %v1033 = vadd.f32 %v976, 1.0
    %v1034 = vadd.f32 %v978, 1.0
    %v1035 = vadd.f32 %v980, 1.0
    %v1036 = vadd.f32 %v982, 1.0
    %v1037 = vadd.f32 %v984, 1.0
    %v1038 = vadd.f32 %v986, 1.0
    %v1039 = vadd.f32 %v988, 1.0
    %v1040 = vadd.f32 %v990, 1.0
    %v1041 = vadd.f32 %v992, 1.0
    %v1042 = vadd.f32 %v994, 1.0
    %v1043 = vadd.f32 %v996, 1.0
    %v1044 = vadd.f32 %v998, 1.0
    %v1045 = vadd.f32 %v1000, 1.0
    %v1046 = vadd.f32 %v1002, 1.0
    %v1047 = vadd.f32 %v1004, 1.0
    %v1048 = vadd.f32 %v1006, 1.0
    %v1049 = vadd.f32 %v1008, 1.0
    %v1050 = vadd.f32 %v1010, 1.0
    %v1051 = vadd.f32 %v1012, 1.0
    %v1052 = vadd.f32 %v1014, 1.0
    %v1053 = vadd.f32 %v1016, 1.0
    %v1054 = vadd.f32 %v1018, 1.0
    %v1055 = vadd.f32 %v1020, 1.0
    %v1056 = vadd.f32 %v1022, 1.0
    %v1057 = vadd.f32 %v1024, 1.0
    %v1058 = vadd.f32 %v1026, 1.0
    %v1059 = vrcp.pop %v1027
    %v1060 = vmul.f32 1.0, %v1059
    %v1061 = vrcp.pop %v1028
    %v1062 = vmul.f32 1.0, %v1061
    %v1063 = vrcp.pop %v1029
    %v1064 = vmul.f32 1.0, %v1063
    %v1065 = vrcp.pop %v1030
    %v1066 = vmul.f32 1.0, %v1065
    %v1067 = vrcp.pop %v1031
    %v1068 = vmul.f32 1.0, %v1067
    %v1069 = vrcp.pop %v1032
    %v1070 = vmul.f32 1.0, %v1069
    %v1071 = vrcp.pop %v1033
    %v1072 = vmul.f32 1.0, %v1071
    %v1073 = vrcp.pop %v1034
    %v1074 = vmul.f32 1.0, %v1073
    %v1075 = vrcp.pop %v1035
    %v1076 = vmul.f32 1.0, %v1075
    %v1077 = vrcp.pop %v1036
    %v1078 = vmul.f32 1.0, %v1077
    %v1079 = vrcp.pop %v1037
    %v1080 = vmul.f32 1.0, %v1079
    %v1081 = vrcp.pop %v1038
    %v1082 = vmul.f32 1.0, %v1081
    %v1083 = vrcp.pop %v1039
    %v1084 = vmul.f32 1.0, %v1083
    %v1085 = vrcp.pop %v1040
    %v1086 = vmul.f32 1.0, %v1085
    %v1087 = vrcp.pop %v1041
    %v1088 = vmul.f32 1.0, %v1087
    %v1089 = vrcp.pop %v1042
    %v1090 = vmul.f32 1.0, %v1089
    %v1091 = vrcp.pop %v1043
    %v1092 = vmul.f32 1.0, %v1091
    %v1093 = vrcp.pop %v1044
    %v1094 = vmul.f32 1.0, %v1093
    %v1095 = vrcp.pop %v1045
    %v1096 = vmul.f32 1.0, %v1095
    %v1097 = vrcp.pop %v1046
    %v1098 = vmul.f32 1.0, %v1097
    %v1099 = vrcp.pop %v1047
    %v1100 = vmul.f32 1.0, %v1099
    %v1101 = vrcp.pop %v1048
    %v1102 = vmul.f32 1.0, %v1101
    %v1103 = vrcp.pop %v1049
    %v1104 = vmul.f32 1.0, %v1103
    %v1105 = vrcp.pop %v1050
    %v1106 = vmul.f32 1.0, %v1105
    %v1107 = vrcp.pop %v1051
    %v1108 = vmul.f32 1.0, %v1107
    %v1109 = vrcp.pop %v1052
    %v1110 = vmul.f32 1.0, %v1109
    %v1111 = vrcp.pop %v1053
    %v1112 = vmul.f32 1.0, %v1111
    %v1113 = vrcp.pop %v1054
    %v1114 = vmul.f32 1.0, %v1113
    %v1115 = vrcp.pop %v1055
    %v1116 = vmul.f32 1.0, %v1115
    %v1117 = vrcp.pop %v1056
    %v1118 = vmul.f32 1.0, %v1117
    %v1119 = vrcp.pop %v1057
    %v1120 = vmul.f32 1.0, %v1119
    %v1121 = vrcp.pop %v1058
    %v1122 = vmul.f32 1.0, %v1121
    %1123 = vst [vmem:[#allocation2] sm:$0xff] %v1060
    %1124 = vst [vmem:[#allocation2 + $0x8] sm:$0xff] %v1062
    %1125 = vst [vmem:[#allocation2 + $0x10] sm:$0xff] %v1064
    %1126 = vst [vmem:[#allocation2 + $0x18] sm:$0xff] %v1066
    %1127 = vst [vmem:[#allocation2 + $0x20] sm:$0xff] %v1068
    %1128 = vst [vmem:[#allocation2 + $0x28] sm:$0xff] %v1070
    %1129 = vst [vmem:[#allocation2 + $0x30] sm:$0xff] %v1072
    %1130 = vst [vmem:[#allocation2 + $0x38] sm:$0xff] %v1074
    %1131 = vst [vmem:[#allocation2 + $0x40] sm:$0xff] %v1076
    %1132 = vst [vmem:[#allocation2 + $0x48] sm:$0xff] %v1078
    %1133 = vst [vmem:[#allocation2 + $0x50] sm:$0xff] %v1080
    %1134 = vst [vmem:[#allocation2 + $0x58] sm:$0xff] %v1082
    %1135 = vst [vmem:[#allocation2 + $0x60] sm:$0xff] %v1084
    %1136 = vst [vmem:[#allocation2 + $0x68] sm:$0xff] %v1086
    %1137 = vst [vmem:[#allocation2 + $0x70] sm:$0xff] %v1088
    %1138 = vst [vmem:[#allocation2 + $0x78] sm:$0xff] %v1090
    %1139 = vst [vmem:[#allocation2 + $0x80] sm:$0xff] %v1092
    %1140 = vst [vmem:[#allocation2 + $0x88] sm:$0xff] %v1094
    %1141 = vst [vmem:[#allocation2 + $0x90] sm:$0xff] %v1096
    %1142 = vst [vmem:[#allocation2 + $0x98] sm:$0xff] %v1098
    %1143 = vst [vmem:[#allocation2 + $0xa0] sm:$0xff] %v1100
    %1144 = vst [vmem:[#allocation2 + $0xa8] sm:$0xff] %v1102
    %1145 = vst [vmem:[#allocation2 + $0xb0] sm:$0xff] %v1104
    %1146 = vst [vmem:[#allocation2 + $0xb8] sm:$0xff] %v1106
    %1147 = vst [vmem:[#allocation2 + $0xc0] sm:$0xff] %v1108
    %1148 = vst [vmem:[#allocation2 + $0xc8] sm:$0xff] %v1110
    %1149 = vst [vmem:[#allocation2 + $0xd0] sm:$0xff] %v1112
    %1150 = vst [vmem:[#allocation2 + $0xd8] sm:$0xff] %v1114
    %1151 = vst [vmem:[#allocation2 + $0xe0] sm:$0xff] %v1116
    %1152 = vst [vmem:[#allocation2 + $0xe8] sm:$0xff] %v1118
    %1153 = vst [vmem:[#allocation2 + $0xf0] sm:$0xff] %v1120
    %1154 = vst [vmem:[#allocation2 + $0xf8] sm:$0xff] %v1122
    // Predicated region
    $region10: #{tpu_custom_call.1} parent=1 // pred_check
      _
    $region11: #{tpu_custom_call.1} parent=1 // pred_check_branch
      %1156 = sbr.rel (0) target = $region13
    $region12: #{tpu_custom_call.1} parent=1 // pred_region
      %s1158 = ssub.s32 4096, 4096
      %1159 = vsyncadd [#allocation3], %s1158
      %s1160 = sshll.u32 [#allocation2], 4
      %s1161 = int_to_ptr.vmem [resolvable:$true] %s1160
      %1166 = dma.vmem_to_hbm [thread:$0]  %s1161, 4096, %s2, [#allocation3], 128, 128, 8
    $region13: #{tpu_custom_call.1} parent=1 // pred_fallthru
      _
    // Predicated region
    $region14: #{tpu_custom_call.1} parent=1 // pred_check
      _
    $region15: #{tpu_custom_call.1} parent=1 // pred_check_branch
      %1168 = sbr.rel (0) target = $region17
    $region16: #{tpu_custom_call.1} parent=1 // pred_region
      %1169 = dma.done [#allocation3], 4096
    $region17: #{tpu_custom_call.1} parent=1 // pred_fallthru
      _
    %1170 = vsyncpa [#allocation3], 1

</llo_original>
